<compile_context>
chip_gen: v6e
topology: v6e:2x2x1
jax: 0.10.0
libtpu: 0.0.40
codegen_flags: <defaults>
</compile_context>

<pallas_src>
import functools

import jax
import jax.numpy as jnp
from jax.experimental import pallas as pl
from jax.experimental.pallas import tpu as pltpu


def _round_up(n, m):
    return ((n + m - 1) // m) * m


def _fused_mlp_kernel(x_ref, w_ref, b_ref, out_ref, *, acts, in_dim, out_dim):
    """Fused MLP forward over one (TB, in_dim) batch tile.

    x_ref  : (TB, in_dim)   un-padded input features (pipelined per tile)
    w_ref  : (NL, P, P)     zero-padded, pre-transposed weight slab (VMEM-resident)
    b_ref  : (NL, 1, P)     zero-padded bias slab (VMEM-resident)
    out_ref: (TB, out_dim)
    """
    p = w_ref.shape[2]
    h = x_ref[...]
    k = in_dim                        # first layer contracts over the real fan-in
    for li, act in enumerate(acts):   # li is a Python int -> static, fully unrolled
        w = w_ref[li, :k, :]          # static slice of the resident slab
        h = jnp.dot(h, w, preferred_element_type=jnp.float32) + b_ref[li]
        if act == "relu":
            h = jnp.maximum(h, 0.0)
        elif act == "tanh":
            h = jnp.tanh(h)
        k = p                         # later layers are P-wide (padded cols stay 0)
    out_ref[...] = h[:, :out_dim].astype(out_ref.dtype)


@functools.partial(jax.jit, static_argnames=("acts", "out_dim", "block_batch"))
def multitask_nn_forward(x, w_slab, b_slab, *, acts, out_dim=2, block_batch=2048):
    B, F = x.shape
    NL, P, _ = w_slab.shape

    # Batch tile: large enough to amortize per-grid-step overhead, multiple of 8
    # sublanes.  Even at 2048 rows the x tile is only 2048*F*4 bytes (<<VMEM).
    TB = min(block_batch, _round_up(B, 8))
    Bp = _round_up(B, TB)
    if Bp != B:
        x = jnp.pad(x, ((0, Bp - B), (0, 0)))

    grid = (Bp // TB,)

    cost = pl.CostEstimate(
        flops=2 * Bp * (F * P + (NL - 1) * P * P),
        transcendentals=Bp * P,
        bytes_accessed=4 * (Bp * F + Bp * out_dim + NL * P * P + NL * P),
    )

    out = pl.pallas_call(
        functools.partial(_fused_mlp_kernel, acts=acts, in_dim=F, out_dim=out_dim),
        out_shape=jax.ShapeDtypeStruct((Bp, out_dim), jnp.float32),
        grid=grid,
        in_specs=[
            pl.BlockSpec((TB, F), lambda i: (i, 0)),          # x: pipelined per tile
            pl.BlockSpec((NL, P, P), lambda i: (0, 0, 0)),    # weights: VMEM-resident
            pl.BlockSpec((NL, 1, P), lambda i: (0, 0, 0)),    # biases:  VMEM-resident
        ],
        out_specs=pl.BlockSpec((TB, out_dim), lambda i: (i, 0)),
        compiler_params=pltpu.CompilerParams(
            dimension_semantics=("parallel",)),               # megacore on v7x
        cost_estimate=cost,
    )(x, w_slab, b_slab)
    return out[:B]


def _init_linear(key, fan_in, fan_out):
    """PyTorch nn.Linear-style init (uniform +-1/sqrt(fan_in)); W stored as [in, out]."""
    kw, kb = jax.random.split(key)
    bound = 1.0 / jnp.sqrt(jnp.float32(fan_in))
    w = jax.random.uniform(kw, (fan_in, fan_out), jnp.float32, -bound, bound)
    b = jax.random.uniform(kb, (fan_out,), jnp.float32, -bound, bound)
    return w, b


def make_params(l_sizes, fnl="tanh", out_dim=2):
    assert l_sizes[-2] == l_sizes[-1], (
        "OldMultiTaskNN's wiring only type-checks when l_sizes[-2] == l_sizes[-1]")
    layer_dims = [(l_sizes[i], l_sizes[i + 1]) for i in range(len(l_sizes) - 1)]  # hl
    layer_dims.append((l_sizes[-2], l_sizes[-1]))                                 # fl
    layer_dims.append((l_sizes[-1], out_dim))                                     # ol
    acts = tuple(["relu"] * (len(l_sizes) - 1) + [fnl, "none"])

    key = jax.random.PRNGKey(0)
    keys = jax.random.split(key, len(layer_dims))
    params = [_init_linear(k, din, dout) for k, (din, dout) in zip(keys, layer_dims)]
    return params, acts


def pack_params(params):
    """Pack per-layer (W, b) into zero-padded slabs: (NL, P, P) and (NL, 1, P)."""
    P = _round_up(max(max(w.shape) for w, _ in params), 8)
    NL = len(params)
    w_slab = jnp.zeros((NL, P, P), jnp.float32)
    b_slab = jnp.zeros((NL, 1, P), jnp.float32)
    for i, (w, b) in enumerate(params):
        din, dout = w.shape
        w_slab = w_slab.at[i, :din, :dout].set(w)
        b_slab = b_slab.at[i, 0, :dout].set(b)
    return w_slab, b_slab


def reference_forward(x, params, acts):
    h = x
    for (w, b), act in zip(params, acts):
        h = h @ w + b
        if act == "relu":
            h = jnp.maximum(h, 0.0)
        elif act == "tanh":
            h = jnp.tanh(h)
    return h


if __name__ == "__main__":
    l_sizes = [16, 32, 32]   # hidden sizes; last two equal as the module requires
    batch = 8

    params, acts = make_params(l_sizes, fnl="tanh")
    w_slab, b_slab = pack_params(params)
    x = jax.random.normal(jax.random.PRNGKey(0), (batch, l_sizes[0]), jnp.float32)

    out = multitask_nn_forward(x, w_slab, b_slab, acts=acts, out_dim=2)
    out = jax.block_until_ready(out)

    ref = reference_forward(x, params, acts)
    assert out.shape == (batch, 2), out.shape
    assert jnp.allclose(out, ref, atol=1e-5, rtol=1e-5), "mismatch vs JAX reference"

    print("KERNEL_OK")
</pallas_src>

<mosaic_0001>
module attributes {stable_mosaic.version = 11 : i64} {
  func.func @_fused_mlp_kernel(%arg0: i32, %arg1: memref<8x16xf32, #tpu.memory_space<vmem>>, %arg2: memref<4x32x32xf32, #tpu.memory_space<vmem>>, %arg3: memref<4x1x32xf32, #tpu.memory_space<vmem>>, %arg4: memref<8x2xf32, #tpu.memory_space<vmem>>) attributes {dimension_semantics = [#tpu.dimension_semantics<parallel>], iteration_bounds = array<i64: 1>, scalar_prefetch = 0 : i64, scratch_operands = 0 : i64, tpu.core_type = #tpu.core_type<tc>, window_params = [{transform_indices = @transform_0, window_bounds = array<i64: 8, 16>}, {pipeline_mode = #tpu.pipeline_mode<synchronous>, transform_indices = @transform_1, window_bounds = array<i64: 4, 32, 32>}, {pipeline_mode = #tpu.pipeline_mode<synchronous>, transform_indices = @transform_2, window_bounds = array<i64: 4, 1, 32>}, {transform_indices = @transform_3, window_bounds = array<i64: 8, 2>}]} {
    %c0 = arith.constant 0 : index
    %c0_0 = arith.constant 0 : index
    %0 = vector.load %arg1[%c0, %c0_0] : memref<8x16xf32, #tpu.memory_space<vmem>>, vector<8x16xf32>
    %c0_1 = arith.constant 0 : index
    %c0_2 = arith.constant 0 : index
    %c0_3 = arith.constant 0 : index
    %1 = vector.load %arg2[%c0_1, %c0_2, %c0_3] : memref<4x32x32xf32, #tpu.memory_space<vmem>>, vector<1x16x32xf32>
    %2 = vector.shape_cast %1 : vector<1x16x32xf32> to vector<16x32xf32>
    %cst = arith.constant dense<0.000000e+00> : vector<8x32xf32>
    %3 = tpu.matmul %0, %2, %cst {dimension_numbers = #tpu.dot_dimension_numbers<[1], [0], [0], [1], [0, 0, 1, 1], [], []>} : vector<8x16xf32>, vector<16x32xf32>, vector<8x32xf32> -> vector<8x32xf32>
    %c0_4 = arith.constant 0 : index
    %c0_5 = arith.constant 0 : index
    %c0_6 = arith.constant 0 : index
    %4 = vector.load %arg3[%c0_4, %c0_5, %c0_6] : memref<4x1x32xf32, #tpu.memory_space<vmem>>, vector<1x1x32xf32>
    %5 = vector.shape_cast %4 : vector<1x1x32xf32> to vector<1x32xf32>
    %6 = vector.broadcast %5 : vector<1x32xf32> to vector<8x32xf32>
    %7 = arith.addf %3, %6 : vector<8x32xf32>
    %cst_7 = arith.constant 0.000000e+00 : f32
    %8 = vector.broadcast %cst_7 : f32 to vector<8x32xf32>
    %9 = arith.maximumf %7, %8 : vector<8x32xf32>
    %c1 = arith.constant 1 : index
    %c0_8 = arith.constant 0 : index
    %c0_9 = arith.constant 0 : index
    %10 = vector.load %arg2[%c1, %c0_8, %c0_9] : memref<4x32x32xf32, #tpu.memory_space<vmem>>, vector<1x32x32xf32>
    %11 = vector.shape_cast %10 : vector<1x32x32xf32> to vector<32x32xf32>
    %cst_10 = arith.constant dense<0.000000e+00> : vector<8x32xf32>
    %12 = tpu.matmul %9, %11, %cst_10 {dimension_numbers = #tpu.dot_dimension_numbers<[1], [0], [0], [1], [0, 0, 1, 1], [], []>} : vector<8x32xf32>, vector<32x32xf32>, vector<8x32xf32> -> vector<8x32xf32>
    %c1_11 = arith.constant 1 : index
    %c0_12 = arith.constant 0 : index
    %c0_13 = arith.constant 0 : index
    %13 = vector.load %arg3[%c1_11, %c0_12, %c0_13] : memref<4x1x32xf32, #tpu.memory_space<vmem>>, vector<1x1x32xf32>
    %14 = vector.shape_cast %13 : vector<1x1x32xf32> to vector<1x32xf32>
    %15 = vector.broadcast %14 : vector<1x32xf32> to vector<8x32xf32>
    %16 = arith.addf %12, %15 : vector<8x32xf32>
    %cst_14 = arith.constant 0.000000e+00 : f32
    %17 = vector.broadcast %cst_14 : f32 to vector<8x32xf32>
    %18 = arith.maximumf %16, %17 : vector<8x32xf32>
    %c2 = arith.constant 2 : index
    %c0_15 = arith.constant 0 : index
    %c0_16 = arith.constant 0 : index
    %19 = vector.load %arg2[%c2, %c0_15, %c0_16] : memref<4x32x32xf32, #tpu.memory_space<vmem>>, vector<1x32x32xf32>
    %20 = vector.shape_cast %19 : vector<1x32x32xf32> to vector<32x32xf32>
    %cst_17 = arith.constant dense<0.000000e+00> : vector<8x32xf32>
    %21 = tpu.matmul %18, %20, %cst_17 {dimension_numbers = #tpu.dot_dimension_numbers<[1], [0], [0], [1], [0, 0, 1, 1], [], []>} : vector<8x32xf32>, vector<32x32xf32>, vector<8x32xf32> -> vector<8x32xf32>
    %c2_18 = arith.constant 2 : index
    %c0_19 = arith.constant 0 : index
    %c0_20 = arith.constant 0 : index
    %22 = vector.load %arg3[%c2_18, %c0_19, %c0_20] : memref<4x1x32xf32, #tpu.memory_space<vmem>>, vector<1x1x32xf32>
    %23 = vector.shape_cast %22 : vector<1x1x32xf32> to vector<1x32xf32>
    %24 = vector.broadcast %23 : vector<1x32xf32> to vector<8x32xf32>
    %25 = arith.addf %21, %24 : vector<8x32xf32>
    %26 = math.tanh %25 : vector<8x32xf32>
    %c3 = arith.constant 3 : index
    %c0_21 = arith.constant 0 : index
    %c0_22 = arith.constant 0 : index
    %27 = vector.load %arg2[%c3, %c0_21, %c0_22] : memref<4x32x32xf32, #tpu.memory_space<vmem>>, vector<1x32x32xf32>
    %28 = vector.shape_cast %27 : vector<1x32x32xf32> to vector<32x32xf32>
    %cst_23 = arith.constant dense<0.000000e+00> : vector<8x32xf32>
    %29 = tpu.matmul %26, %28, %cst_23 {dimension_numbers = #tpu.dot_dimension_numbers<[1], [0], [0], [1], [0, 0, 1, 1], [], []>} : vector<8x32xf32>, vector<32x32xf32>, vector<8x32xf32> -> vector<8x32xf32>
    %c3_24 = arith.constant 3 : index
    %c0_25 = arith.constant 0 : index
    %c0_26 = arith.constant 0 : index
    %30 = vector.load %arg3[%c3_24, %c0_25, %c0_26] : memref<4x1x32xf32, #tpu.memory_space<vmem>>, vector<1x1x32xf32>
    %31 = vector.shape_cast %30 : vector<1x1x32xf32> to vector<1x32xf32>
    %32 = vector.broadcast %31 : vector<1x32xf32> to vector<8x32xf32>
    %33 = arith.addf %29, %32 : vector<8x32xf32>
    %34 = vector.extract_strided_slice %33 {offsets = [0, 0], sizes = [8, 2], strides = [1, 1]} : vector<8x32xf32> to vector<8x2xf32>
    %c0_27 = arith.constant 0 : index
    %c0_28 = arith.constant 0 : index
    %35 = vector.load %arg4[%c0_27, %c0_28] : memref<8x2xf32, #tpu.memory_space<vmem>>, vector<8x2xf32>
    tpu.vector_store %arg4[%c0_27, %c0_28], %34 {strides = array<i32>} : memref<8x2xf32, #tpu.memory_space<vmem>>, vector<8x2xf32>,
    return
  }
  func.func @transform_0(%arg0: i32) -> (i32, i32) {
    %c0_i32 = arith.constant 0 : i32
    %c0_i32_0 = arith.constant 0 : i32
    return %arg0, %c0_i32 : i32, i32
  }
  func.func @transform_1(%arg0: i32) -> (i32, i32, i32) {
    %c0_i32 = arith.constant 0 : i32
    %c0_i32_0 = arith.constant 0 : i32
    %c0_i32_1 = arith.constant 0 : i32
    %c0_i32_2 = arith.constant 0 : i32
    return %c0_i32, %c0_i32_0, %c0_i32_1 : i32, i32, i32
  }
  func.func @transform_2(%arg0: i32) -> (i32, i32, i32) {
    %c0_i32 = arith.constant 0 : i32
    %c0_i32_0 = arith.constant 0 : i32
    %c0_i32_1 = arith.constant 0 : i32
    %c0_i32_2 = arith.constant 0 : i32
    return %c0_i32, %c0_i32_0, %c0_i32_1 : i32, i32, i32
  }
  func.func @transform_3(%arg0: i32) -> (i32, i32) {
    %c0_i32 = arith.constant 0 : i32
    %c0_i32_0 = arith.constant 0 : i32
    return %arg0, %c0_i32 : i32, i32
  }
}

</mosaic_0001>

<llo_original>
// kernel: multitask_nn_forward.1
$region0: #{multitask_nn_forward.1}
  #allocation0 [shape = 'u32[]', space=smem, size = 0x4, offset = 0x4, fixed_abs, tag = 'smem constant byte address 0x4 - core index']
  #allocation1 [shape = 'u32[144,128]{1,0:T(1,128)}', space=vmem, size = 0x12000, scoped, tag = 'internal scratch']
  %s0 = inlined_call_operand.hbm [shape: f32[8,16], index: 0, kind: input, shape index: {}]
  %s1 = inlined_call_operand.hbm [shape: f32[4,32,32], index: 1, kind: input, shape index: {}]
  %s2 = inlined_call_operand.hbm [shape: f32[4,1,32], index: 2, kind: input, shape index: {}]
  %s3 = inlined_call_operand.vmem [shape: f32[8,2], index: 3, kind: output, shape index: {}]
  %s4 = sld [smem:[#allocation0]]
  $region34: #{multitask_nn_forward.1} parent=0
    _
  %s6 = ssub.s32 1, %s4
  %s7 = scalar_select 0, %s6, %s4
  $region1: #{multitask_nn_forward.1} parent=0
    #allocation2 [shape = 'u8[4096]{0}', space=vmem, size = 0x1000, scoped, tag = 'input window, operand 0, single buffered']
    #allocation3 [shape = 's32[1]{0}', space=sflag, size = 0x4, scoped, tag = 'scoped memory for multitask_nn_forward.1']
    #allocation4 [shape = 'u8[65536]{0}', space=vmem, size = 0x10000, scoped, tag = 'input window, operand 1, single buffered']
    #allocation5 [shape = 's32[1]{0}', space=sflag, size = 0x4, scoped, tag = 'scoped memory for multitask_nn_forward.1']
    #allocation6 [shape = 'u8[2048]{0}', space=vmem, size = 0x800, scoped, tag = 'input window, operand 2, single buffered']
    %8 = vsyncpa [#allocation3], 0
    %9 = vsyncpa [#allocation5], 0
    // Predicated region
    $region2: #{multitask_nn_forward.1} parent=1 // pred_check
      _
    $region3: #{multitask_nn_forward.1} parent=1 // pred_check_branch
      %11 = sbr.rel (0) target = $region5
    $region4: #{multitask_nn_forward.1} parent=1 // pred_region
      %s13 = ssub.s32 128, 128
      %14 = vsyncadd [#allocation3], %s13
      %s16 = sshll.u32 [#allocation2], 4
      %s17 = int_to_ptr.vmem [resolvable:$true] %s16
      %19 = dma.hbm_to_vmem [thread:$0]  %s0, 128, %s17, [#allocation3]
    $region5: #{multitask_nn_forward.1} parent=1 // pred_fallthru
      _
    // Predicated region
    $region6: #{multitask_nn_forward.1} parent=1 // pred_check
      _
    $region7: #{multitask_nn_forward.1} parent=1 // pred_check_branch
      %21 = sbr.rel (0) target = $region9
    $region8: #{multitask_nn_forward.1} parent=1 // pred_region
      %s23 = ssub.s32 2048, 2048
      %24 = vsyncadd [#allocation5], %s23
      %s25 = sshll.u32 [#allocation4], 4
      %s26 = int_to_ptr.vmem [resolvable:$true] %s25
      %31 = dma.hbm_to_vmem [thread:$0]  %s1, 2048, %s26, [#allocation5], 128, 128, 8
    $region9: #{multitask_nn_forward.1} parent=1 // pred_fallthru
      _
    // Predicated region
    $region10: #{multitask_nn_forward.1} parent=1 // pred_check
      _
    $region11: #{multitask_nn_forward.1} parent=1 // pred_check_branch
      %33 = sbr.rel (0) target = $region13
    $region12: #{multitask_nn_forward.1} parent=1 // pred_region
      %s35 = ssub.s32 64, 64
      %36 = vsyncadd [#allocation5], %s35
      %s37 = sshll.u32 [#allocation6], 4
      %s38 = int_to_ptr.vmem [resolvable:$true] %s37
      %43 = dma.hbm_to_vmem [thread:$0]  %s2, 64, %s38, [#allocation5], 16, 16, 1
    $region13: #{multitask_nn_forward.1} parent=1 // pred_fallthru
      _
    // Predicated region
    $region14: #{multitask_nn_forward.1} parent=1 // pred_check
      _
    $region15: #{multitask_nn_forward.1} parent=1 // pred_check_branch
      %45 = sbr.rel (0) target = $region17
    $region16: #{multitask_nn_forward.1} parent=1 // pred_region
      %46 = dma.done [#allocation3], 128
    $region17: #{multitask_nn_forward.1} parent=1 // pred_fallthru
      _
    // Predicated region
    $region18: #{multitask_nn_forward.1} parent=1 // pred_check
      _
    $region19: #{multitask_nn_forward.1} parent=1 // pred_check_branch
      %48 = sbr.rel (0) target = $region21
    $region20: #{multitask_nn_forward.1} parent=1 // pred_region
      %49 = dma.done [#allocation5], 2048
    $region21: #{multitask_nn_forward.1} parent=1 // pred_fallthru
      _
    // Predicated region
    $region22: #{multitask_nn_forward.1} parent=1 // pred_check
      _
    $region23: #{multitask_nn_forward.1} parent=1 // pred_check_branch
      %51 = sbr.rel (0) target = $region25
    $region24: #{multitask_nn_forward.1} parent=1 // pred_region
      %52 = dma.done [#allocation5], 64
    $region25: #{multitask_nn_forward.1} parent=1 // pred_fallthru
      _
    %v53 = vld [vmem:[#allocation2] sm:$0xff]
    %v54 = vld [vmem:[#allocation4] sm:$0xff]
    %v55 = vld [vmem:[#allocation4 + $0x8] sm:$0xff]
    %v56 = vld [vmem:[#allocation6] sm:$0x1]
    %v58 = vlaneseq
    %v59 = vshrl.u32 %v58, 7
    %v60 = vsub.s32 0, %v59
    %v61 = vrot.slane %v56, %v60
    %vm63 = vcmask 130048
    %v65 = vsel %vm63, %v53, 0
    %67 = vmatprep.subr.mxu0 0.0
    %68 = vmatpush1.msra.mxu0 0.0
    %69 = vmatprep.subr.mxu0 0.0
    %70 = vmatpush1.msra.mxu0 0.0
    %71 = vmatprep.subr.mxu0 0.0
    %72 = vmatpush1.msra.mxu0 0.0
    %73 = vmatprep.subr.mxu0 0.0
    %74 = vmatpush1.msra.mxu0 0.0
    %75 = vmatprep.subr.mxu0 0.0
    %76 = vmatpush1.msra.mxu0 0.0
    %77 = vmatprep.subr.mxu0 0.0
    %78 = vmatpush1.msra.mxu0 0.0
    %79 = vmatprep.subr.mxu0 0.0
    %80 = vmatpush1.msra.mxu0 0.0
    %81 = vmatprep.subr.mxu0 0.0
    %82 = vmatpush1.msra.mxu0 0.0
    %83 = vmatprep.subr.mxu0 0.0
    %84 = vmatpush1.msra.mxu0 0.0
    %85 = vmatprep.subr.mxu0 0.0
    %86 = vmatpush1.msra.mxu0 0.0
    %87 = vmatprep.subr.mxu0 0.0
    %88 = vmatpush1.msra.mxu0 0.0
    %89 = vmatprep.subr.mxu0 0.0
    %90 = vmatpush1.msra.mxu0 0.0
    %91 = vmatprep.subr.mxu0 0.0
    %92 = vmatpush1.msra.mxu0 0.0
    %93 = vmatprep.subr.mxu0 0.0
    %94 = vmatpush1.msra.mxu0 0.0
    %95 = vmatprep.subr.mxu0 0.0
    %96 = vmatpush1.msra.mxu0 %v55
    %97 = vmatprep.subr.mxu0 0.0
    %98 = vmatpush1.msra.mxu0 %v54
    %99 = vmatprep.subr.mxu0 0.0
    %100 = vmatpush2.msra.mxu0 0.0
    %101 = vmatprep.subr.mxu0 0.0
    %102 = vmatpush2.msra.mxu0 0.0
    %103 = vmatprep.subr.mxu0 0.0
    %104 = vmatpush2.msra.mxu0 0.0
    %105 = vmatprep.subr.mxu0 0.0
    %106 = vmatpush2.msra.mxu0 0.0
    %107 = vmatprep.subr.mxu0 0.0
    %108 = vmatpush2.msra.mxu0 0.0
    %109 = vmatprep.subr.mxu0 0.0
    %110 = vmatpush2.msra.mxu0 0.0
    %111 = vmatprep.subr.mxu0 0.0
    %112 = vmatpush2.msra.mxu0 0.0
    %113 = vmatprep.subr.mxu0 0.0
    %114 = vmatpush2.msra.mxu0 0.0
    %115 = vmatprep.subr.mxu0 0.0
    %116 = vmatpush2.msra.mxu0 0.0
    %117 = vmatprep.subr.mxu0 0.0
    %118 = vmatpush2.msra.mxu0 0.0
    %119 = vmatprep.subr.mxu0 0.0
    %120 = vmatpush2.msra.mxu0 0.0
    %121 = vmatprep.subr.mxu0 0.0
    %122 = vmatpush2.msra.mxu0 0.0
    %123 = vmatprep.subr.mxu0 0.0
    %124 = vmatpush2.msra.mxu0 0.0
    %125 = vmatprep.subr.mxu0 0.0
    %126 = vmatpush2.msra.mxu0 0.0
    %127 = vmatprep.subr.mxu0 0.0
    %128 = vmatpush2.msra.mxu0 0.0
    %129 = vmatprep.subr.mxu0 0.0
    %130 = vmatpush2.msra.mxu0 0.0
    %131 = vmatprep.mubr.f32.mxu0 0.0
    %132 = vmatmul.mubr.f32.gmra.mxu0 %v65
    %v133 = vpop.f32.mrf.mxu0
    %v134 = vadd.f32 %v61, %v133
    %v135 = vpop.f32.mrf.mxu0
    %136 = vdwg.mxu0
    %v137 = vmax.f32 %v134, 0.0
    %s138 = scalar_lea.vmem [#allocation4], 32
    %v139 = vld [vmem:[%s138] sm:$0xff]
    %v140 = vld [vmem:[%s138 + $0x8] sm:$0xff]
    %v141 = vld [vmem:[%s138 + $0x10] sm:$0xff]
    %v142 = vld [vmem:[%s138 + $0x18] sm:$0xff]
    %s143 = scalar_lea.vmem [#allocation6], 1
    %v144 = vld [vmem:[%s143] sm:$0x1]
    %v146 = vlaneseq
    %v147 = vshrl.u32 %v146, 7
    %v148 = vsub.s32 0, %v147
    %v149 = vrot.slane %v144, %v148
    %vm151 = vcmask 261120
    %v153 = vsel %vm151, %v137, 0
    %155 = vmatprep.subr.mxu0 0.0
    %156 = vmatpush1.msra.mxu0 0.0
    %157 = vmatprep.subr.mxu0 0.0
    %158 = vmatpush1.msra.mxu0 0.0
    %159 = vmatprep.subr.mxu0 0.0
    %160 = vmatpush1.msra.mxu0 0.0
    %161 = vmatprep.subr.mxu0 0.0
    %162 = vmatpush1.msra.mxu0 0.0
    %163 = vmatprep.subr.mxu0 0.0
    %164 = vmatpush1.msra.mxu0 0.0
    %165 = vmatprep.subr.mxu0 0.0
    %166 = vmatpush1.msra.mxu0 0.0
    %167 = vmatprep.subr.mxu0 0.0
    %168 = vmatpush1.msra.mxu0 0.0
    %169 = vmatprep.subr.mxu0 0.0
    %170 = vmatpush1.msra.mxu0 0.0
    %171 = vmatprep.subr.mxu0 0.0
    %172 = vmatpush1.msra.mxu0 0.0
    %173 = vmatprep.subr.mxu0 0.0
    %174 = vmatpush1.msra.mxu0 0.0
    %175 = vmatprep.subr.mxu0 0.0
    %176 = vmatpush1.msra.mxu0 0.0
    %177 = vmatprep.subr.mxu0 0.0
    %178 = vmatpush1.msra.mxu0 0.0
    %179 = vmatprep.subr.mxu0 0.0
    %180 = vmatpush1.msra.mxu0 %v142
    %181 = vmatprep.subr.mxu0 0.0
    %182 = vmatpush1.msra.mxu0 %v141
    %183 = vmatprep.subr.mxu0 0.0
    %184 = vmatpush1.msra.mxu0 %v140
    %185 = vmatprep.subr.mxu0 0.0
    %186 = vmatpush1.msra.mxu0 %v139
    %187 = vmatprep.subr.mxu0 0.0
    %188 = vmatpush2.msra.mxu0 0.0
    %189 = vmatprep.subr.mxu0 0.0
    %190 = vmatpush2.msra.mxu0 0.0
    %191 = vmatprep.subr.mxu0 0.0
    %192 = vmatpush2.msra.mxu0 0.0
    %193 = vmatprep.subr.mxu0 0.0
    %194 = vmatpush2.msra.mxu0 0.0
    %195 = vmatprep.subr.mxu0 0.0
    %196 = vmatpush2.msra.mxu0 0.0
    %197 = vmatprep.subr.mxu0 0.0
    %198 = vmatpush2.msra.mxu0 0.0
    %199 = vmatprep.subr.mxu0 0.0
    %200 = vmatpush2.msra.mxu0 0.0
    %201 = vmatprep.subr.mxu0 0.0
    %202 = vmatpush2.msra.mxu0 0.0
    %203 = vmatprep.subr.mxu0 0.0
    %204 = vmatpush2.msra.mxu0 0.0
    %205 = vmatprep.subr.mxu0 0.0
    %206 = vmatpush2.msra.mxu0 0.0
    %207 = vmatprep.subr.mxu0 0.0
    %208 = vmatpush2.msra.mxu0 0.0
    %209 = vmatprep.subr.mxu0 0.0
    %210 = vmatpush2.msra.mxu0 0.0
    %211 = vmatprep.subr.mxu0 0.0
    %212 = vmatpush2.msra.mxu0 0.0
    %213 = vmatprep.subr.mxu0 0.0
    %214 = vmatpush2.msra.mxu0 0.0
    %215 = vmatprep.subr.mxu0 0.0
    %216 = vmatpush2.msra.mxu0 0.0
    %217 = vmatprep.subr.mxu0 0.0
    %218 = vmatpush2.msra.mxu0 0.0
    %219 = vmatprep.mubr.f32.mxu0 0.0
    %220 = vmatmul.mubr.f32.gmra.mxu0 %v153
    %v221 = vpop.f32.mrf.mxu0
    %v222 = vadd.f32 %v149, %v221
    %v223 = vpop.f32.mrf.mxu0
    %224 = vdwg.mxu0
    %v225 = vmax.f32 %v222, 0.0
    %s226 = scalar_lea.vmem [#allocation4], 64
    %v227 = vld [vmem:[%s226] sm:$0xff]
    %v228 = vld [vmem:[%s226 + $0x8] sm:$0xff]
    %v229 = vld [vmem:[%s226 + $0x10] sm:$0xff]
    %v230 = vld [vmem:[%s226 + $0x18] sm:$0xff]
    %s231 = scalar_lea.vmem [#allocation6], 2
    %v232 = vld [vmem:[%s231] sm:$0x1]
    %v234 = vlaneseq
    %v235 = vshrl.u32 %v234, 7
    %v236 = vsub.s32 0, %v235
    %v237 = vrot.slane %v232, %v236
    %v240 = vsel %vm151, %v225, 0
    %242 = vmatprep.subr.mxu0 0.0
    %243 = vmatpush1.msra.mxu0 0.0
    %244 = vmatprep.subr.mxu0 0.0
    %245 = vmatpush1.msra.mxu0 0.0
    %246 = vmatprep.subr.mxu0 0.0
    %247 = vmatpush1.msra.mxu0 0.0
    %248 = vmatprep.subr.mxu0 0.0
    %249 = vmatpush1.msra.mxu0 0.0
    %250 = vmatprep.subr.mxu0 0.0
    %251 = vmatpush1.msra.mxu0 0.0
    %252 = vmatprep.subr.mxu0 0.0
    %253 = vmatpush1.msra.mxu0 0.0
    %254 = vmatprep.subr.mxu0 0.0
    %255 = vmatpush1.msra.mxu0 0.0
    %256 = vmatprep.subr.mxu0 0.0
    %257 = vmatpush1.msra.mxu0 0.0
    %258 = vmatprep.subr.mxu0 0.0
    %259 = vmatpush1.msra.mxu0 0.0
    %260 = vmatprep.subr.mxu0 0.0
    %261 = vmatpush1.msra.mxu0 0.0
    %262 = vmatprep.subr.mxu0 0.0
    %263 = vmatpush1.msra.mxu0 0.0
    %264 = vmatprep.subr.mxu0 0.0
    %265 = vmatpush1.msra.mxu0 0.0
    %266 = vmatprep.subr.mxu0 0.0
    %267 = vmatpush1.msra.mxu0 %v230
    %268 = vmatprep.subr.mxu0 0.0
    %269 = vmatpush1.msra.mxu0 %v229
    %270 = vmatprep.subr.mxu0 0.0
    %271 = vmatpush1.msra.mxu0 %v228
    %272 = vmatprep.subr.mxu0 0.0
    %273 = vmatpush1.msra.mxu0 %v227
    %274 = vmatprep.subr.mxu0 0.0
    %275 = vmatpush2.msra.mxu0 0.0
    %276 = vmatprep.subr.mxu0 0.0
    %277 = vmatpush2.msra.mxu0 0.0
    %278 = vmatprep.subr.mxu0 0.0
    %279 = vmatpush2.msra.mxu0 0.0
    %280 = vmatprep.subr.mxu0 0.0
    %281 = vmatpush2.msra.mxu0 0.0
    %282 = vmatprep.subr.mxu0 0.0
    %283 = vmatpush2.msra.mxu0 0.0
    %284 = vmatprep.subr.mxu0 0.0
    %285 = vmatpush2.msra.mxu0 0.0
    %286 = vmatprep.subr.mxu0 0.0
    %287 = vmatpush2.msra.mxu0 0.0
    %288 = vmatprep.subr.mxu0 0.0
    %289 = vmatpush2.msra.mxu0 0.0
    %290 = vmatprep.subr.mxu0 0.0
    %291 = vmatpush2.msra.mxu0 0.0
    %292 = vmatprep.subr.mxu0 0.0
    %293 = vmatpush2.msra.mxu0 0.0
    %294 = vmatprep.subr.mxu0 0.0
    %295 = vmatpush2.msra.mxu0 0.0
    %296 = vmatprep.subr.mxu0 0.0
    %297 = vmatpush2.msra.mxu0 0.0
    %298 = vmatprep.subr.mxu0 0.0
    %299 = vmatpush2.msra.mxu0 0.0
    %300 = vmatprep.subr.mxu0 0.0
    %301 = vmatpush2.msra.mxu0 0.0
    %302 = vmatprep.subr.mxu0 0.0
    %303 = vmatpush2.msra.mxu0 0.0
    %304 = vmatprep.subr.mxu0 0.0
    %305 = vmatpush2.msra.mxu0 0.0
    %306 = vmatprep.mubr.f32.mxu0 0.0
    %307 = vmatmul.mubr.f32.gmra.mxu0 %v240
    %v308 = vpop.f32.mrf.mxu0
    %v309 = vadd.f32 %v237, %v308
    %v310 = vpop.f32.mrf.mxu0
    %311 = vdwg.mxu0
    %v312 = vtanh.pop %v309
    %s313 = scalar_lea.vmem [#allocation4], 96
    %v314 = vld [vmem:[%s313] sm:$0xff]
    %v315 = vld [vmem:[%s313 + $0x8] sm:$0xff]
    %v316 = vld [vmem:[%s313 + $0x10] sm:$0xff]
    %v317 = vld [vmem:[%s313 + $0x18] sm:$0xff]
    %s318 = scalar_lea.vmem [#allocation6], 3
    %v319 = vld [vmem:[%s318] sm:$0x1]
    %v321 = vlaneseq
    %v322 = vshrl.u32 %v321, 7
    %v323 = vsub.s32 0, %v322
    %v324 = vrot.slane %v319, %v323
    %v327 = vsel %vm151, %v312, 0
    %329 = vmatprep.subr.mxu0 0.0
    %330 = vmatpush1.msra.mxu0 0.0
    %331 = vmatprep.subr.mxu0 0.0
    %332 = vmatpush1.msra.mxu0 0.0
    %333 = vmatprep.subr.mxu0 0.0
    %334 = vmatpush1.msra.mxu0 0.0
    %335 = vmatprep.subr.mxu0 0.0
    %336 = vmatpush1.msra.mxu0 0.0
    %337 = vmatprep.subr.mxu0 0.0
    %338 = vmatpush1.msra.mxu0 0.0
    %339 = vmatprep.subr.mxu0 0.0
    %340 = vmatpush1.msra.mxu0 0.0
    %341 = vmatprep.subr.mxu0 0.0
    %342 = vmatpush1.msra.mxu0 0.0
    %343 = vmatprep.subr.mxu0 0.0
    %344 = vmatpush1.msra.mxu0 0.0
    %345 = vmatprep.subr.mxu0 0.0
    %346 = vmatpush1.msra.mxu0 0.0
    %347 = vmatprep.subr.mxu0 0.0
    %348 = vmatpush1.msra.mxu0 0.0
    %349 = vmatprep.subr.mxu0 0.0
    %350 = vmatpush1.msra.mxu0 0.0
    %351 = vmatprep.subr.mxu0 0.0
    %352 = vmatpush1.msra.mxu0 0.0
    %353 = vmatprep.subr.mxu0 0.0
    %354 = vmatpush1.msra.mxu0 %v317
    %355 = vmatprep.subr.mxu0 0.0
    %356 = vmatpush1.msra.mxu0 %v316
    %357 = vmatprep.subr.mxu0 0.0
    %358 = vmatpush1.msra.mxu0 %v315
    %359 = vmatprep.subr.mxu0 0.0
    %360 = vmatpush1.msra.mxu0 %v314
    %361 = vmatprep.subr.mxu0 0.0
    %362 = vmatpush2.msra.mxu0 0.0
    %363 = vmatprep.subr.mxu0 0.0
    %364 = vmatpush2.msra.mxu0 0.0
    %365 = vmatprep.subr.mxu0 0.0
    %366 = vmatpush2.msra.mxu0 0.0
    %367 = vmatprep.subr.mxu0 0.0
    %368 = vmatpush2.msra.mxu0 0.0
    %369 = vmatprep.subr.mxu0 0.0
    %370 = vmatpush2.msra.mxu0 0.0
    %371 = vmatprep.subr.mxu0 0.0
    %372 = vmatpush2.msra.mxu0 0.0
    %373 = vmatprep.subr.mxu0 0.0
    %374 = vmatpush2.msra.mxu0 0.0
    %375 = vmatprep.subr.mxu0 0.0
    %376 = vmatpush2.msra.mxu0 0.0
    %377 = vmatprep.subr.mxu0 0.0
    %378 = vmatpush2.msra.mxu0 0.0
    %379 = vmatprep.subr.mxu0 0.0
    %380 = vmatpush2.msra.mxu0 0.0
    %381 = vmatprep.subr.mxu0 0.0
    %382 = vmatpush2.msra.mxu0 0.0
    %383 = vmatprep.subr.mxu0 0.0
    %384 = vmatpush2.msra.mxu0 0.0
    %385 = vmatprep.subr.mxu0 0.0
    %386 = vmatpush2.msra.mxu0 0.0
    %387 = vmatprep.subr.mxu0 0.0
    %388 = vmatpush2.msra.mxu0 0.0
    %389 = vmatprep.subr.mxu0 0.0
    %390 = vmatpush2.msra.mxu0 0.0
    %391 = vmatprep.subr.mxu0 0.0
    %392 = vmatpush2.msra.mxu0 0.0
    %393 = vmatprep.mubr.f32.mxu0 0.0
    %394 = vmatmul.mubr.f32.gmra.mxu0 %v327
    %v395 = vpop.f32.mrf.mxu0
    %v396 = vadd.f32 %v324, %v395
    %v397 = vpop.f32.mrf.mxu0
    %398 = vdwg.mxu0
    %vm399 = vcmask 15360
    %400 = vst.msk [vmem:[%s3] sm:$0xff] %vm399, %v396
    // Predicated region
    $region26: #{multitask_nn_forward.1} parent=1 // pred_check
      _
    $region27: #{multitask_nn_forward.1} parent=1 // pred_check_branch
      %402 = sbr.rel (0) target = $region29
    $region28: #{multitask_nn_forward.1} parent=1 // pred_region
      _
    $region29: #{multitask_nn_forward.1} parent=1 // pred_fallthru
      _
    // Predicated region
    $region30: #{multitask_nn_forward.1} parent=1 // pred_check
      _
    $region31: #{multitask_nn_forward.1} parent=1 // pred_check_branch
      %404 = sbr.rel (0) target = $region33
    $region32: #{multitask_nn_forward.1} parent=1 // pred_region
      _
    $region33: #{multitask_nn_forward.1} parent=1 // pred_fallthru
      _
    %405 = vsyncpa [#allocation3], 1
    %406 = vsyncpa [#allocation5], 1

</llo_original>
